<compile_context>
chip_gen: v7x
topology: tpu7x:2x2x1
jax: 0.10.0
libtpu: 0.0.40
codegen_flags: <defaults>
</compile_context>

<pallas_src>
import functools

import jax
import jax.numpy as jnp
from jax.experimental import pallas as pl
from jax.experimental.pallas import tpu as pltpu

N_ACTIONS = 19          # len(actions) in the PyTorch module
LASER_SAMPLES = 32      # laser_sample_count (input feature size)
H1, H2, H3 = 64, 64, 32
HEAD_OUT = 1 + N_ACTIONS   # fused [V | A] head width
_SUBLANE = 16              # batch-tile alignment (covers bf16 (16,128) packing too)


def _round_up(n, m):
    return ((n + m - 1) // m) * m


def dueling_dqn_kernel(x_ref,
                       w1_ref, b1_ref,
                       w2_ref, b2_ref,
                       w3_ref, b3_ref,
                       wh_ref, bh_ref,
                       out_ref):
    """One batch tile: fc1->relu->fc2->relu->fc3->relu-> fused [V|A] head.

    Matmul operands are in the weights' dtype (bf16 on the MXU fast path when
    enabled); bias-add / ReLU operate on the f32 accumulator."""
    mxu_dtype = w1_ref.dtype

    x = x_ref[...]

    h1 = jnp.dot(x, w1_ref[...], preferred_element_type=jnp.float32) + b1_ref[...]
    h1 = jnp.maximum(h1, 0.0).astype(mxu_dtype)

    h2 = jnp.dot(h1, w2_ref[...], preferred_element_type=jnp.float32) + b2_ref[...]
    h2 = jnp.maximum(h2, 0.0).astype(mxu_dtype)

    h3 = jnp.dot(h2, w3_ref[...], preferred_element_type=jnp.float32) + b3_ref[...]
    h3 = jnp.maximum(h3, 0.0).astype(mxu_dtype)

    head = jnp.dot(h3, wh_ref[...], preferred_element_type=jnp.float32) + bh_ref[...]
    out_ref[...] = head.astype(out_ref.dtype)


@functools.partial(jax.jit, static_argnames=("tile_b", "use_bf16"))
def dueling_dqn_forward(x, params, tile_b=512, use_bf16=True):
    """Returns (V, A) just like DuelingDeepQNetwork.forward."""
    (w1, b1, w2, b2, w3, b3, wv, bv, wa, ba) = params
    B, L = x.shape

    # --- fuse the V and A heads into one lane-dense (H3, 20) matmul ------------
    wh = jnp.concatenate([wv, wa], axis=1)      # (H3, 1 + n_actions)
    bh = jnp.concatenate([bv, ba], axis=1)      # (1,  1 + n_actions)

    mxu_dtype = jnp.bfloat16 if use_bf16 else jnp.float32
    w1c, w2c, w3c, whc = (w.astype(mxu_dtype) for w in (w1, w2, w3, wh))
    b1c, b2c, b3c, bhc = (b.astype(jnp.float32) for b in (b1, b2, b3, bh))
    xc = x.astype(mxu_dtype)

    # --- batch tiling: large tiles, batch padded to a sublane-aligned multiple --
    tile = _round_up(max(1, min(tile_b, B)), _SUBLANE)
    b_pad = _round_up(B, tile)
    if b_pad != B:
        xc = jnp.pad(xc, ((0, b_pad - B), (0, 0)))
    grid = (b_pad // tile,)

    def batch_spec(feat):
        return pl.BlockSpec((tile, feat), lambda i: (i, 0))

    def full_spec(shape):
        return pl.BlockSpec(shape, lambda i: (0,) * len(shape))

    in_specs = [
        batch_spec(L),
        full_spec(w1c.shape), full_spec(b1c.shape),
        full_spec(w2c.shape), full_spec(b2c.shape),
        full_spec(w3c.shape), full_spec(b3c.shape),
        full_spec(whc.shape), full_spec(bhc.shape),
    ]

    out = pl.pallas_call(
        dueling_dqn_kernel,
        grid_spec=pltpu.PrefetchScalarGridSpec(
            num_scalar_prefetch=0,
            grid=grid,
            in_specs=in_specs,
            out_specs=batch_spec(HEAD_OUT),
        ),
        out_shape=jax.ShapeDtypeStruct((b_pad, HEAD_OUT), jnp.float32),
        compiler_params=pltpu.CompilerParams(
            dimension_semantics=("parallel",)),
    )(xc, w1c, b1c, w2c, b2c, w3c, b3c, whc, bhc)

    out = out[:B]
    return out[:, :1], out[:, 1:]


def init_linear(key, fan_in, fan_out):
    """Matches torch.nn.Linear's U(-1/sqrt(fan_in), 1/sqrt(fan_in)) init.
    Weight stored [in, out] (transposed vs. PyTorch) so the kernel does x @ W."""
    kw, kb = jax.random.split(key)
    bound = 1.0 / (fan_in ** 0.5)
    w = jax.random.uniform(kw, (fan_in, fan_out), jnp.float32, -bound, bound)
    b = jax.random.uniform(kb, (1, fan_out), jnp.float32, -bound, bound)
    return w, b


def make_params(key):
    k1, k2, k3, kv, ka = jax.random.split(key, 5)
    w1, b1 = init_linear(k1, LASER_SAMPLES, H1)
    w2, b2 = init_linear(k2, H1, H2)
    w3, b3 = init_linear(k3, H2, H3)
    wv, bv = init_linear(kv, H3, 1)
    wa, ba = init_linear(ka, H3, N_ACTIONS)
    return (w1, b1, w2, b2, w3, b3, wv, bv, wa, ba)


def reference_forward(x, params, dtype=jnp.float32):
    """Pure-JAX reference. dtype=bfloat16 emulates the bf16-weight kernel path
    (cast operands to bf16, accumulate in f32)."""
    (w1, b1, w2, b2, w3, b3, wv, bv, wa, ba) = params

    def cast(a):
        return a.astype(dtype).astype(jnp.float32)

    h1 = jax.nn.relu(cast(x) @ cast(w1) + b1)
    h2 = jax.nn.relu(cast(h1) @ cast(w2) + b2)
    h3 = jax.nn.relu(cast(h2) @ cast(w3) + b3)
    return cast(h3) @ cast(wv) + bv, cast(h3) @ cast(wa) + ba


if __name__ == "__main__":
    key = jax.random.PRNGKey(0)
    kx, kx2, kp = jax.random.split(key, 3)
    params = make_params(kp)

    # Primary run: bf16 operands on the MXU, fused lane-dense head output.
    batch = 8
    x = jax.random.normal(kx, (batch, LASER_SAMPLES), jnp.float32)
    V, A = dueling_dqn_forward(x, params, tile_b=512, use_bf16=True)
    V, A = jax.block_until_ready((V, A))
    assert V.shape == (batch, 1) and A.shape == (batch, N_ACTIONS)
    V_ref, A_ref = reference_forward(x, params, dtype=jnp.bfloat16)
    assert jnp.allclose(V, V_ref, atol=2e-2, rtol=2e-2)
    assert jnp.allclose(A, A_ref, atol=2e-2, rtol=2e-2)

    # Exact f32 path + batch that is NOT a multiple of the tile (exercises padding).
    batch2 = 40
    x2 = jax.random.normal(kx2, (batch2, LASER_SAMPLES), jnp.float32)
    V2, A2 = dueling_dqn_forward(x2, params, tile_b=16, use_bf16=False)
    V2, A2 = jax.block_until_ready((V2, A2))
    V2_ref, A2_ref = reference_forward(x2, params)
    assert V2.shape == (batch2, 1) and A2.shape == (batch2, N_ACTIONS)
    assert jnp.allclose(V2, V2_ref, atol=1e-5, rtol=1e-5)
    assert jnp.allclose(A2, A2_ref, atol=1e-5, rtol=1e-5)

    print("KERNEL_OK")
</pallas_src>

<mosaic_0001>
module attributes {stable_mosaic.version = 11 : i64} {
  func.func @dueling_dqn_kernel(%arg0: i32, %arg1: memref<16x32xbf16, #tpu.memory_space<vmem>>, %arg2: memref<32x64xbf16, #tpu.memory_space<vmem>>, %arg3: memref<1x64xf32, #tpu.memory_space<vmem>>, %arg4: memref<64x64xbf16, #tpu.memory_space<vmem>>, %arg5: memref<1x64xf32, #tpu.memory_space<vmem>>, %arg6: memref<64x32xbf16, #tpu.memory_space<vmem>>, %arg7: memref<1x32xf32, #tpu.memory_space<vmem>>, %arg8: memref<32x20xbf16, #tpu.memory_space<vmem>>, %arg9: memref<1x20xf32, #tpu.memory_space<vmem>>, %arg10: memref<16x20xf32, #tpu.memory_space<vmem>>) attributes {dimension_semantics = [#tpu.dimension_semantics<parallel>], iteration_bounds = array<i64: 1>, scalar_prefetch = 0 : i64, scratch_operands = 0 : i64, tpu.core_type = #tpu.core_type<tc>, window_params = [{transform_indices = @transform_0, window_bounds = array<i64: 16, 32>}, {pipeline_mode = #tpu.pipeline_mode<synchronous>, transform_indices = @transform_1, window_bounds = array<i64: 32, 64>}, {pipeline_mode = #tpu.pipeline_mode<synchronous>, transform_indices = @transform_2, window_bounds = array<i64: 1, 64>}, {pipeline_mode = #tpu.pipeline_mode<synchronous>, transform_indices = @transform_3, window_bounds = array<i64: 64, 64>}, {pipeline_mode = #tpu.pipeline_mode<synchronous>, transform_indices = @transform_4, window_bounds = array<i64: 1, 64>}, {pipeline_mode = #tpu.pipeline_mode<synchronous>, transform_indices = @transform_5, window_bounds = array<i64: 64, 32>}, {pipeline_mode = #tpu.pipeline_mode<synchronous>, transform_indices = @transform_6, window_bounds = array<i64: 1, 32>}, {pipeline_mode = #tpu.pipeline_mode<synchronous>, transform_indices = @transform_7, window_bounds = array<i64: 32, 20>}, {pipeline_mode = #tpu.pipeline_mode<synchronous>, transform_indices = @transform_8, window_bounds = array<i64: 1, 20>}, {transform_indices = @transform_9, window_bounds = array<i64: 16, 20>}]} {
    %c0 = arith.constant 0 : index
    %c0_0 = arith.constant 0 : index
    %0 = vector.load %arg1[%c0, %c0_0] : memref<16x32xbf16, #tpu.memory_space<vmem>>, vector<16x32xbf16>
    %c0_1 = arith.constant 0 : index
    %c0_2 = arith.constant 0 : index
    %1 = vector.load %arg2[%c0_1, %c0_2] : memref<32x64xbf16, #tpu.memory_space<vmem>>, vector<32x64xbf16>
    %cst = arith.constant dense<0.000000e+00> : vector<16x64xf32>
    %2 = tpu.matmul %0, %1, %cst {dimension_numbers = #tpu.dot_dimension_numbers<[1], [0], [0], [1], [0, 0, 1, 1], [], []>} : vector<16x32xbf16>, vector<32x64xbf16>, vector<16x64xf32> -> vector<16x64xf32>
    %c0_3 = arith.constant 0 : index
    %c0_4 = arith.constant 0 : index
    %3 = vector.load %arg3[%c0_3, %c0_4] : memref<1x64xf32, #tpu.memory_space<vmem>>, vector<1x64xf32>
    %4 = vector.broadcast %3 : vector<1x64xf32> to vector<16x64xf32>
    %5 = arith.addf %2, %4 : vector<16x64xf32>
    %cst_5 = arith.constant 0.000000e+00 : f32
    %6 = vector.broadcast %cst_5 : f32 to vector<16x64xf32>
    %7 = arith.maximumf %5, %6 : vector<16x64xf32>
    %8 = arith.truncf %7 : vector<16x64xf32> to vector<16x64xbf16>
    %c0_6 = arith.constant 0 : index
    %c0_7 = arith.constant 0 : index
    %9 = vector.load %arg4[%c0_6, %c0_7] : memref<64x64xbf16, #tpu.memory_space<vmem>>, vector<64x64xbf16>
    %cst_8 = arith.constant dense<0.000000e+00> : vector<16x64xf32>
    %10 = tpu.matmul %8, %9, %cst_8 {dimension_numbers = #tpu.dot_dimension_numbers<[1], [0], [0], [1], [0, 0, 1, 1], [], []>} : vector<16x64xbf16>, vector<64x64xbf16>, vector<16x64xf32> -> vector<16x64xf32>
    %c0_9 = arith.constant 0 : index
    %c0_10 = arith.constant 0 : index
    %11 = vector.load %arg5[%c0_9, %c0_10] : memref<1x64xf32, #tpu.memory_space<vmem>>, vector<1x64xf32>
    %12 = vector.broadcast %11 : vector<1x64xf32> to vector<16x64xf32>
    %13 = arith.addf %10, %12 : vector<16x64xf32>
    %cst_11 = arith.constant 0.000000e+00 : f32
    %14 = vector.broadcast %cst_11 : f32 to vector<16x64xf32>
    %15 = arith.maximumf %13, %14 : vector<16x64xf32>
    %16 = arith.truncf %15 : vector<16x64xf32> to vector<16x64xbf16>
    %c0_12 = arith.constant 0 : index
    %c0_13 = arith.constant 0 : index
    %17 = vector.load %arg6[%c0_12, %c0_13] : memref<64x32xbf16, #tpu.memory_space<vmem>>, vector<64x32xbf16>
    %cst_14 = arith.constant dense<0.000000e+00> : vector<16x32xf32>
    %18 = tpu.matmul %16, %17, %cst_14 {dimension_numbers = #tpu.dot_dimension_numbers<[1], [0], [0], [1], [0, 0, 1, 1], [], []>} : vector<16x64xbf16>, vector<64x32xbf16>, vector<16x32xf32> -> vector<16x32xf32>
    %c0_15 = arith.constant 0 : index
    %c0_16 = arith.constant 0 : index
    %19 = vector.load %arg7[%c0_15, %c0_16] : memref<1x32xf32, #tpu.memory_space<vmem>>, vector<1x32xf32>
    %20 = vector.broadcast %19 : vector<1x32xf32> to vector<16x32xf32>
    %21 = arith.addf %18, %20 : vector<16x32xf32>
    %cst_17 = arith.constant 0.000000e+00 : f32
    %22 = vector.broadcast %cst_17 : f32 to vector<16x32xf32>
    %23 = arith.maximumf %21, %22 : vector<16x32xf32>
    %24 = arith.truncf %23 : vector<16x32xf32> to vector<16x32xbf16>
    %c0_18 = arith.constant 0 : index
    %c0_19 = arith.constant 0 : index
    %25 = vector.load %arg8[%c0_18, %c0_19] : memref<32x20xbf16, #tpu.memory_space<vmem>>, vector<32x20xbf16>
    %cst_20 = arith.constant dense<0.000000e+00> : vector<16x20xf32>
    %26 = tpu.matmul %24, %25, %cst_20 {dimension_numbers = #tpu.dot_dimension_numbers<[1], [0], [0], [1], [0, 0, 1, 1], [], []>} : vector<16x32xbf16>, vector<32x20xbf16>, vector<16x20xf32> -> vector<16x20xf32>
    %c0_21 = arith.constant 0 : index
    %c0_22 = arith.constant 0 : index
    %27 = vector.load %arg9[%c0_21, %c0_22] : memref<1x20xf32, #tpu.memory_space<vmem>>, vector<1x20xf32>
    %28 = vector.broadcast %27 : vector<1x20xf32> to vector<16x20xf32>
    %29 = arith.addf %26, %28 : vector<16x20xf32>
    %c0_23 = arith.constant 0 : index
    %c0_24 = arith.constant 0 : index
    %30 = vector.load %arg10[%c0_23, %c0_24] : memref<16x20xf32, #tpu.memory_space<vmem>>, vector<16x20xf32>
    tpu.vector_store %arg10[%c0_23, %c0_24], %29 {strides = array<i32>} : memref<16x20xf32, #tpu.memory_space<vmem>>, vector<16x20xf32>,
    return
  }
  func.func @transform_0(%arg0: i32) -> (i32, i32) {
    %c0_i32 = arith.constant 0 : i32
    %c0_i32_0 = arith.constant 0 : i32
    return %arg0, %c0_i32 : i32, i32
  }
  func.func @transform_1(%arg0: i32) -> (i32, i32) {
    %c0_i32 = arith.constant 0 : i32
    %c0_i32_0 = arith.constant 0 : i32
    %c0_i32_1 = arith.constant 0 : i32
    return %c0_i32, %c0_i32_0 : i32, i32
  }
  func.func @transform_2(%arg0: i32) -> (i32, i32) {
    %c0_i32 = arith.constant 0 : i32
    %c0_i32_0 = arith.constant 0 : i32
    %c0_i32_1 = arith.constant 0 : i32
    return %c0_i32, %c0_i32_0 : i32, i32
  }
  func.func @transform_3(%arg0: i32) -> (i32, i32) {
    %c0_i32 = arith.constant 0 : i32
    %c0_i32_0 = arith.constant 0 : i32
    %c0_i32_1 = arith.constant 0 : i32
    return %c0_i32, %c0_i32_0 : i32, i32
  }
  func.func @transform_4(%arg0: i32) -> (i32, i32) {
    %c0_i32 = arith.constant 0 : i32
    %c0_i32_0 = arith.constant 0 : i32
    %c0_i32_1 = arith.constant 0 : i32
    return %c0_i32, %c0_i32_0 : i32, i32
  }
  func.func @transform_5(%arg0: i32) -> (i32, i32) {
    %c0_i32 = arith.constant 0 : i32
    %c0_i32_0 = arith.constant 0 : i32
    %c0_i32_1 = arith.constant 0 : i32
    return %c0_i32, %c0_i32_0 : i32, i32
  }
  func.func @transform_6(%arg0: i32) -> (i32, i32) {
    %c0_i32 = arith.constant 0 : i32
    %c0_i32_0 = arith.constant 0 : i32
    %c0_i32_1 = arith.constant 0 : i32
    return %c0_i32, %c0_i32_0 : i32, i32
  }
  func.func @transform_7(%arg0: i32) -> (i32, i32) {
    %c0_i32 = arith.constant 0 : i32
    %c0_i32_0 = arith.constant 0 : i32
    %c0_i32_1 = arith.constant 0 : i32
    return %c0_i32, %c0_i32_0 : i32, i32
  }
  func.func @transform_8(%arg0: i32) -> (i32, i32) {
    %c0_i32 = arith.constant 0 : i32
    %c0_i32_0 = arith.constant 0 : i32
    %c0_i32_1 = arith.constant 0 : i32
    return %c0_i32, %c0_i32_0 : i32, i32
  }
  func.func @transform_9(%arg0: i32) -> (i32, i32) {
    %c0_i32 = arith.constant 0 : i32
    %c0_i32_0 = arith.constant 0 : i32
    return %arg0, %c0_i32 : i32, i32
  }
}

</mosaic_0001>

<llo_original>
// kernel: dueling_dqn_forward.1
$region0: #{dueling_dqn_forward.1}
  #allocation0 [shape = 'u32[]', space=smem, size = 0x4, offset = 0x4, fixed_abs, tag = 'smem constant byte address 0x4 - core index']
  #allocation1 [shape = 'u32[144,128]{1,0:T(1,128)}', space=vmem, size = 0x12000, scoped, tag = 'internal scratch']
  %s0 = inlined_call_operand.vmem [shape: bf16[16,32], index: 0, kind: input, shape index: {}]
  %s1 = inlined_call_operand.vmem [shape: bf16[32,64], index: 1, kind: input, shape index: {}]
  %s2 = inlined_call_operand.vmem [shape: f32[1,64], index: 2, kind: input, shape index: {}]
  %s3 = inlined_call_operand.vmem [shape: bf16[64,64], index: 3, kind: input, shape index: {}]
  %s4 = inlined_call_operand.vmem [shape: f32[1,64], index: 4, kind: input, shape index: {}]
  %s5 = inlined_call_operand.vmem [shape: bf16[64,32], index: 5, kind: input, shape index: {}]
  %s6 = inlined_call_operand.vmem [shape: f32[1,32], index: 6, kind: input, shape index: {}]
  %s7 = inlined_call_operand.vmem [shape: bf16[32,20], index: 7, kind: input, shape index: {}]
  %s8 = inlined_call_operand.vmem [shape: f32[1,20], index: 8, kind: input, shape index: {}]
  %s9 = inlined_call_operand.vmem [shape: f32[16,20], index: 9, kind: output, shape index: {}]
  %s10 = sld [smem:[#allocation0]]
  $region46: #{dueling_dqn_forward.1} parent=0
    _
  %s12 = ssub.s32 1, %s10
  %s13 = scalar_select 0, %s12, %s10
  // Predicated region
  $region2: #{dueling_dqn_forward.1} parent=0 // pred_check
    _
  $region3: #{dueling_dqn_forward.1} parent=0 // pred_check_branch
    %15 = sbr.rel (0) target = $region5
  $region4: #{dueling_dqn_forward.1} parent=0 // pred_region
    _
  $region5: #{dueling_dqn_forward.1} parent=0 // pred_fallthru
    _
  // Predicated region
  $region6: #{dueling_dqn_forward.1} parent=0 // pred_check
    _
  $region7: #{dueling_dqn_forward.1} parent=0 // pred_check_branch
    %17 = sbr.rel (0) target = $region9
  $region8: #{dueling_dqn_forward.1} parent=0 // pred_region
    _
  $region9: #{dueling_dqn_forward.1} parent=0 // pred_fallthru
    _
  // Predicated region
  $region10: #{dueling_dqn_forward.1} parent=0 // pred_check
    _
  $region11: #{dueling_dqn_forward.1} parent=0 // pred_check_branch
    %19 = sbr.rel (0) target = $region13
  $region12: #{dueling_dqn_forward.1} parent=0 // pred_region
    _
  $region13: #{dueling_dqn_forward.1} parent=0 // pred_fallthru
    _
  // Predicated region
  $region14: #{dueling_dqn_forward.1} parent=0 // pred_check
    _
  $region15: #{dueling_dqn_forward.1} parent=0 // pred_check_branch
    %21 = sbr.rel (0) target = $region17
  $region16: #{dueling_dqn_forward.1} parent=0 // pred_region
    _
  $region17: #{dueling_dqn_forward.1} parent=0 // pred_fallthru
    _
  // Predicated region
  $region18: #{dueling_dqn_forward.1} parent=0 // pred_check
    _
  $region19: #{dueling_dqn_forward.1} parent=0 // pred_check_branch
    %23 = sbr.rel (0) target = $region21
  $region20: #{dueling_dqn_forward.1} parent=0 // pred_region
    _
  $region21: #{dueling_dqn_forward.1} parent=0 // pred_fallthru
    _
  // Predicated region
  $region22: #{dueling_dqn_forward.1} parent=0 // pred_check
    _
  $region23: #{dueling_dqn_forward.1} parent=0 // pred_check_branch
    %25 = sbr.rel (0) target = $region25
  $region24: #{dueling_dqn_forward.1} parent=0 // pred_region
    _
  $region25: #{dueling_dqn_forward.1} parent=0 // pred_fallthru
    _
  // Predicated region
  $region26: #{dueling_dqn_forward.1} parent=0 // pred_check
    _
  $region27: #{dueling_dqn_forward.1} parent=0 // pred_check_branch
    %27 = sbr.rel (0) target = $region29
  $region28: #{dueling_dqn_forward.1} parent=0 // pred_region
    _
  $region29: #{dueling_dqn_forward.1} parent=0 // pred_fallthru
    _
  // Predicated region
  $region30: #{dueling_dqn_forward.1} parent=0 // pred_check
    _
  $region31: #{dueling_dqn_forward.1} parent=0 // pred_check_branch
    %29 = sbr.rel (0) target = $region33
  $region32: #{dueling_dqn_forward.1} parent=0 // pred_region
    _
  $region33: #{dueling_dqn_forward.1} parent=0 // pred_fallthru
    _
  // Predicated region
  $region34: #{dueling_dqn_forward.1} parent=0 // pred_check
    _
  $region35: #{dueling_dqn_forward.1} parent=0 // pred_check_branch
    %31 = sbr.rel (0) target = $region37
  $region36: #{dueling_dqn_forward.1} parent=0 // pred_region
    _
  $region37: #{dueling_dqn_forward.1} parent=0 // pred_fallthru
    _
  %v33 = vld [vmem:[%s0] sm:$0xf]
  %v34 = vld [vmem:[%s0 + $0x4] sm:$0xf]
  %v35 = vld [vmem:[%s1] sm:$0xf]
  %v36 = vld [vmem:[%s1 + $0x4] sm:$0xf]
  %v37 = vld [vmem:[%s1 + $0x8] sm:$0xf]
  %v38 = vld [vmem:[%s1 + $0xc] sm:$0xf]
  %v39 = vld [vmem:[%s2] sm:$0x1]
  %v41 = vlaneseq
  %v42 = vshrl.u32 %v41, 7
  %v43 = vsub.s32 0, %v42
  %v44 = vrot.slane %v39, %v43
  %v48 = vunpack.c.l.b16 %v33
  %v49 = vunpack.c.l.b16 %v34
  %v50 = vpack.c.b16 %v49, %v48
  %v55 = vunpack.c.l.b16 %v35
  %v56 = vunpack.c.l.b16 %v36
  %v57 = vunpack.c.l.b16 %v37
  %v58 = vunpack.c.l.b16 %v38
  %v59 = vpack.c.b16 %v56, %v55
  %v60 = vpack.c.b16 %v58, %v57
  %vm63 = vcmask 261120
  %v65 = vsel %vm63, %v50, 0
  %67 = vmatprep.subr.bf16.mxu0 0
  %68 = vmatpush1.bf16.msra.mxu0 %v59
  %69 = vmatprep.subr.bf16.mxu0 0
  %70 = vmatpush1.bf16.msra.mxu0 %v60
  %71 = vmatprep.subr.bf16.mxu0 0
  %72 = vmatpush1.bf16.msra.mxu0 0
  %73 = vmatprep.subr.bf16.mxu0 0
  %74 = vmatpush1.bf16.msra.mxu0 0
  %75 = vmatprep.subr.bf16.mxu0 0
  %76 = vmatpush1.bf16.msra.mxu0 0
  %77 = vmatprep.subr.bf16.mxu0 0
  %78 = vmatpush1.bf16.msra.mxu0 0
  %79 = vmatprep.subr.bf16.mxu0 0
  %80 = vmatpush1.bf16.msra.mxu0 0
  %81 = vmatprep.subr.bf16.mxu0 0
  %82 = vmatpush1.bf16.msra.mxu0 0
  %83 = vmatprep.subr.bf16.mxu0 0
  %84 = vmatpush1.bf16.msra.mxu0 0
  %85 = vmatprep.subr.bf16.mxu0 0
  %86 = vmatpush1.bf16.msra.mxu0 0
  %87 = vmatprep.subr.bf16.mxu0 0
  %88 = vmatpush1.bf16.msra.mxu0 0
  %89 = vmatprep.subr.bf16.mxu0 0
  %90 = vmatpush1.bf16.msra.mxu0 0
  %91 = vmatprep.subr.bf16.mxu0 0
  %92 = vmatpush1.bf16.msra.mxu0 0
  %93 = vmatprep.subr.bf16.mxu0 0
  %94 = vmatpush1.bf16.msra.mxu0 0
  %95 = vmatprep.subr.bf16.mxu0 0
  %96 = vmatpush1.bf16.msra.mxu0 0
  %97 = vmatprep.subr.bf16.mxu0 0
  %98 = vmatpush1.bf16.msra.mxu0 0
  %99 = vmatprep.mubr.bf16.mxu0 0
  %100 = vmatmul.mubr.bf16.gmra.mrb[0].mxu0 %v65
  %v101 = vpop.f32.mrb[0].mxu0
  %v102 = vadd.f32 %v44, %v101
  %v103 = vpop.f32.mrb[0].mxu0
  %v104 = vpop.f32.mrb[0].mxu0
  %v105 = vadd.f32 %v44, %v104
  %v106 = vpop.f32.mrb[0].mxu0
  %107 = vdwg.mxu0
  %v108 = vmax.f32 %v102, 0.0
  %v109 = vmax.f32 %v105, 0.0
  %v110 = vpack.c.bf16 %v109, %v108
  %v111 = vld [vmem:[%s3] sm:$0xf]
  %v112 = vld [vmem:[%s3 + $0x4] sm:$0xf]
  %v113 = vld [vmem:[%s3 + $0x8] sm:$0xf]
  %v114 = vld [vmem:[%s3 + $0xc] sm:$0xf]
  %v115 = vld [vmem:[%s3 + $0x10] sm:$0xf]
  %v116 = vld [vmem:[%s3 + $0x14] sm:$0xf]
  %v117 = vld [vmem:[%s3 + $0x18] sm:$0xf]
  %v118 = vld [vmem:[%s3 + $0x1c] sm:$0xf]
  %v119 = vld [vmem:[%s4] sm:$0x1]
  %v121 = vlaneseq
  %v122 = vshrl.u32 %v121, 7
  %v123 = vsub.s32 0, %v122
  %v124 = vrot.slane %v119, %v123
  %v134 = vunpack.c.l.b16 %v111
  %v135 = vunpack.c.l.b16 %v112
  %v136 = vunpack.c.l.b16 %v113
  %v137 = vunpack.c.l.b16 %v114
  %v138 = vunpack.c.l.b16 %v115
  %v139 = vunpack.c.l.b16 %v116
  %v140 = vunpack.c.l.b16 %v117
  %v141 = vunpack.c.l.b16 %v118
  %v142 = vpack.c.b16 %v135, %v134
  %v143 = vpack.c.b16 %v137, %v136
  %v144 = vpack.c.b16 %v139, %v138
  %v145 = vpack.c.b16 %v141, %v140
  %vm150 = vcmask 523264
  %v152 = vsel %vm150, %v110, 0
  %154 = vmatprep.subr.bf16.mxu0 0
  %155 = vmatpush1.bf16.msra.mxu0 %v142
  %156 = vmatprep.subr.bf16.mxu0 0
  %157 = vmatpush1.bf16.msra.mxu0 %v143
  %158 = vmatprep.subr.bf16.mxu0 0
  %159 = vmatpush1.bf16.msra.mxu0 %v144
  %160 = vmatprep.subr.bf16.mxu0 0
  %161 = vmatpush1.bf16.msra.mxu0 %v145
  %162 = vmatprep.subr.bf16.mxu0 0
  %163 = vmatpush1.bf16.msra.mxu0 0
  %164 = vmatprep.subr.bf16.mxu0 0
  %165 = vmatpush1.bf16.msra.mxu0 0
  %166 = vmatprep.subr.bf16.mxu0 0
  %167 = vmatpush1.bf16.msra.mxu0 0
  %168 = vmatprep.subr.bf16.mxu0 0
  %169 = vmatpush1.bf16.msra.mxu0 0
  %170 = vmatprep.subr.bf16.mxu0 0
  %171 = vmatpush1.bf16.msra.mxu0 0
  %172 = vmatprep.subr.bf16.mxu0 0
  %173 = vmatpush1.bf16.msra.mxu0 0
  %174 = vmatprep.subr.bf16.mxu0 0
  %175 = vmatpush1.bf16.msra.mxu0 0
  %176 = vmatprep.subr.bf16.mxu0 0
  %177 = vmatpush1.bf16.msra.mxu0 0
  %178 = vmatprep.subr.bf16.mxu0 0
  %179 = vmatpush1.bf16.msra.mxu0 0
  %180 = vmatprep.subr.bf16.mxu0 0
  %181 = vmatpush1.bf16.msra.mxu0 0
  %182 = vmatprep.subr.bf16.mxu0 0
  %183 = vmatpush1.bf16.msra.mxu0 0
  %184 = vmatprep.subr.bf16.mxu0 0
  %185 = vmatpush1.bf16.msra.mxu0 0
  %186 = vmatprep.mubr.bf16.mxu0 0
  %187 = vmatmul.mubr.bf16.gmra.mrb[0].mxu0 %v152
  %v188 = vpop.f32.mrb[0].mxu0
  %v189 = vadd.f32 %v124, %v188
  %v190 = vpop.f32.mrb[0].mxu0
  %v191 = vpop.f32.mrb[0].mxu0
  %v192 = vadd.f32 %v124, %v191
  %v193 = vpop.f32.mrb[0].mxu0
  %194 = vdwg.mxu0
  %v195 = vmax.f32 %v189, 0.0
  %v196 = vmax.f32 %v192, 0.0
  %v197 = vpack.c.bf16 %v196, %v195
  %v198 = vld [vmem:[%s5] sm:$0xf]
  %v199 = vld [vmem:[%s5 + $0x4] sm:$0xf]
  %v200 = vld [vmem:[%s5 + $0x8] sm:$0xf]
  %v201 = vld [vmem:[%s5 + $0xc] sm:$0xf]
  %v202 = vld [vmem:[%s5 + $0x10] sm:$0xf]
  %v203 = vld [vmem:[%s5 + $0x14] sm:$0xf]
  %v204 = vld [vmem:[%s5 + $0x18] sm:$0xf]
  %v205 = vld [vmem:[%s5 + $0x1c] sm:$0xf]
  %v206 = vld [vmem:[%s6] sm:$0x1]
  %v208 = vlaneseq
  %v209 = vshrl.u32 %v208, 7
  %v210 = vsub.s32 0, %v209
  %v211 = vrot.slane %v206, %v210
  %v221 = vunpack.c.l.b16 %v198
  %v222 = vunpack.c.l.b16 %v199
  %v223 = vunpack.c.l.b16 %v200
  %v224 = vunpack.c.l.b16 %v201
  %v225 = vunpack.c.l.b16 %v202
  %v226 = vunpack.c.l.b16 %v203
  %v227 = vunpack.c.l.b16 %v204
  %v228 = vunpack.c.l.b16 %v205
  %v229 = vpack.c.b16 %v222, %v221
  %v230 = vpack.c.b16 %v224, %v223
  %v231 = vpack.c.b16 %v226, %v225
  %v232 = vpack.c.b16 %v228, %v227
  %v238 = vsel %vm150, %v197, 0
  %240 = vmatprep.subr.bf16.mxu0 0
  %241 = vmatpush1.bf16.msra.mxu0 %v229
  %242 = vmatprep.subr.bf16.mxu0 0
  %243 = vmatpush1.bf16.msra.mxu0 %v230
  %244 = vmatprep.subr.bf16.mxu0 0
  %245 = vmatpush1.bf16.msra.mxu0 %v231
  %246 = vmatprep.subr.bf16.mxu0 0
  %247 = vmatpush1.bf16.msra.mxu0 %v232
  %248 = vmatprep.subr.bf16.mxu0 0
  %249 = vmatpush1.bf16.msra.mxu0 0
  %250 = vmatprep.subr.bf16.mxu0 0
  %251 = vmatpush1.bf16.msra.mxu0 0
  %252 = vmatprep.subr.bf16.mxu0 0
  %253 = vmatpush1.bf16.msra.mxu0 0
  %254 = vmatprep.subr.bf16.mxu0 0
  %255 = vmatpush1.bf16.msra.mxu0 0
  %256 = vmatprep.subr.bf16.mxu0 0
  %257 = vmatpush1.bf16.msra.mxu0 0
  %258 = vmatprep.subr.bf16.mxu0 0
  %259 = vmatpush1.bf16.msra.mxu0 0
  %260 = vmatprep.subr.bf16.mxu0 0
  %261 = vmatpush1.bf16.msra.mxu0 0
  %262 = vmatprep.subr.bf16.mxu0 0
  %263 = vmatpush1.bf16.msra.mxu0 0
  %264 = vmatprep.subr.bf16.mxu0 0
  %265 = vmatpush1.bf16.msra.mxu0 0
  %266 = vmatprep.subr.bf16.mxu0 0
  %267 = vmatpush1.bf16.msra.mxu0 0
  %268 = vmatprep.subr.bf16.mxu0 0
  %269 = vmatpush1.bf16.msra.mxu0 0
  %270 = vmatprep.subr.bf16.mxu0 0
  %271 = vmatpush1.bf16.msra.mxu0 0
  %272 = vmatprep.mubr.bf16.mxu0 0
  %273 = vmatmul.mubr.bf16.gmra.mrb[0].mxu0 %v238
  %v274 = vpop.f32.mrb[0].mxu0
  %v275 = vadd.f32 %v211, %v274
  %v276 = vpop.f32.mrb[0].mxu0
  %v277 = vpop.f32.mrb[0].mxu0
  %v278 = vadd.f32 %v211, %v277
  %v279 = vpop.f32.mrb[0].mxu0
  %280 = vdwg.mxu0
  %v281 = vmax.f32 %v275, 0.0
  %v282 = vmax.f32 %v278, 0.0
  %v283 = vpack.c.bf16 %v282, %v281
  %v284 = vld [vmem:[%s7] sm:$0xf]
  %v285 = vld [vmem:[%s7 + $0x4] sm:$0xf]
  %v286 = vld [vmem:[%s7 + $0x8] sm:$0xf]
  %v287 = vld [vmem:[%s7 + $0xc] sm:$0xf]
  %v288 = vld [vmem:[%s8] sm:$0x1]
  %v290 = vlaneseq
  %v291 = vshrl.u32 %v290, 7
  %v292 = vsub.s32 0, %v291
  %v293 = vrot.slane %v288, %v292
  %v299 = vunpack.c.l.b16 %v284
  %v300 = vunpack.c.l.b16 %v285
  %v301 = vunpack.c.l.b16 %v286
  %v302 = vunpack.c.l.b16 %v287
  %v303 = vpack.c.b16 %v300, %v299
  %v304 = vpack.c.b16 %v302, %v301
  %v308 = vsel %vm63, %v283, 0
  %310 = vmatprep.subr.bf16.mxu0 0
  %311 = vmatpush1.bf16.msra.mxu0 %v303
  %312 = vmatprep.subr.bf16.mxu0 0
  %313 = vmatpush1.bf16.msra.mxu0 %v304
  %314 = vmatprep.subr.bf16.mxu0 0
  %315 = vmatpush1.bf16.msra.mxu0 0
  %316 = vmatprep.subr.bf16.mxu0 0
  %317 = vmatpush1.bf16.msra.mxu0 0
  %318 = vmatprep.subr.bf16.mxu0 0
  %319 = vmatpush1.bf16.msra.mxu0 0
  %320 = vmatprep.subr.bf16.mxu0 0
  %321 = vmatpush1.bf16.msra.mxu0 0
  %322 = vmatprep.subr.bf16.mxu0 0
  %323 = vmatpush1.bf16.msra.mxu0 0
  %324 = vmatprep.subr.bf16.mxu0 0
  %325 = vmatpush1.bf16.msra.mxu0 0
  %326 = vmatprep.subr.bf16.mxu0 0
  %327 = vmatpush1.bf16.msra.mxu0 0
  %328 = vmatprep.subr.bf16.mxu0 0
  %329 = vmatpush1.bf16.msra.mxu0 0
  %330 = vmatprep.subr.bf16.mxu0 0
  %331 = vmatpush1.bf16.msra.mxu0 0
  %332 = vmatprep.subr.bf16.mxu0 0
  %333 = vmatpush1.bf16.msra.mxu0 0
  %334 = vmatprep.subr.bf16.mxu0 0
  %335 = vmatpush1.bf16.msra.mxu0 0
  %336 = vmatprep.subr.bf16.mxu0 0
  %337 = vmatpush1.bf16.msra.mxu0 0
  %338 = vmatprep.subr.bf16.mxu0 0
  %339 = vmatpush1.bf16.msra.mxu0 0
  %340 = vmatprep.subr.bf16.mxu0 0
  %341 = vmatpush1.bf16.msra.mxu0 0
  %342 = vmatprep.mubr.bf16.mxu0 0
  %343 = vmatmul.mubr.bf16.gmra.mrb[0].mxu0 %v308
  %v344 = vpop.f32.mrb[0].mxu0
  %v345 = vadd.f32 %v293, %v344
  %v346 = vpop.f32.mrb[0].mxu0
  %v347 = vpop.f32.mrb[0].mxu0
  %v348 = vadd.f32 %v293, %v347
  %v349 = vpop.f32.mrb[0].mxu0
  %350 = vdwg.mxu0
  %vm351 = vcmask 162816
  %352 = vst.msk [vmem:[%s9] sm:$0xff] %vm351, %v345
  %353 = vst.msk [vmem:[%s9 + $0x8] sm:$0xff] %vm351, %v348
  // Predicated region
  $region38: #{dueling_dqn_forward.1} parent=0 // pred_check
    _
  $region39: #{dueling_dqn_forward.1} parent=0 // pred_check_branch
    %355 = sbr.rel (0) target = $region41
  $region40: #{dueling_dqn_forward.1} parent=0 // pred_region
    _
  $region41: #{dueling_dqn_forward.1} parent=0 // pred_fallthru
    _
  // Predicated region
  $region42: #{dueling_dqn_forward.1} parent=0 // pred_check
    _
  $region43: #{dueling_dqn_forward.1} parent=0 // pred_check_branch
    %357 = sbr.rel (0) target = $region45
  $region44: #{dueling_dqn_forward.1} parent=0 // pred_region
    _
  $region45: #{dueling_dqn_forward.1} parent=0 // pred_fallthru
    _

</llo_original>
